<compile_context>
chip_gen: v7x
topology: tpu7x:2x2x1
jax: 0.10.0
libtpu: 0.0.40
codegen_flags: <defaults>
</compile_context>

<pallas_src>
import jax
import jax.numpy as jnp
from jax.experimental import pallas as pl
from jax.experimental.pallas import tpu as pltpu


def _round_up(x, m):
    return ((x + m - 1) // m) * m


def custom_head_kernel(x_ref, w1_ref, b1_ref, w2_ref, b2_ref, o_ref):
    # In-kernel cast of the streamed f32 x tile to bf16 (rides under DMA/MXU).
    x = x_ref[...].astype(jnp.bfloat16)                       # (TB, in_f) bf16
    # Linear 1: bf16 inputs -> MXU -> f32 accumulator.
    h = jnp.dot(x, w1_ref[...],
                preferred_element_type=jnp.float32)           # (TB, hid) f32
    h = jnp.maximum(h + b1_ref[...], 0.0)                     # bias + ReLU (VPU, f32)
    # Dropout(p=0.3): identity at inference.
    # Linear 2: downcast activation to bf16 for the MXU, accumulate in f32.
    y = jnp.dot(h.astype(jnp.bfloat16), w2_ref[...],
                preferred_element_type=jnp.float32)           # (TB, out_f) f32
    o_ref[...] = (y + b2_ref[...]).astype(o_ref.dtype)


def init_custom_head(w1, b1, w2, b2):
    """One-time parameter prep (hoisted out of the per-call path).

    w1: (in_f, hid); b1: (hid,); w2: (hid, out_f); b2: (out_f,).
    (PyTorch stores Linear weights as (out, in); pre-transpose before calling.)
    """
    hid = w1.shape[1]
    out_f = w2.shape[1]
    return {
        "w1": w1.astype(jnp.bfloat16),
        "b1": b1.reshape(1, hid).astype(jnp.float32),
        "w2": w2.astype(jnp.bfloat16),
        "b2": b2.reshape(1, out_f).astype(jnp.float32),
    }


def custom_head(x, params, *, block_b=2048):
    """x: (B, in_features) f32; params from init_custom_head()."""
    B, in_f = x.shape
    hid = params["w1"].shape[1]
    out_f = params["w2"].shape[1]

    # Batch tile: multiple of 16 (bf16 sublane packing), capped at the
    # (16-rounded) batch size.  Ragged last tile handled by Pallas masking.
    tb = min(_round_up(max(block_b, 16), 16), _round_up(B, 16))
    grid = (pl.cdiv(B, tb),)

    out = pl.pallas_call(
        custom_head_kernel,
        out_shape=jax.ShapeDtypeStruct((B, out_f), x.dtype),
        grid=grid,
        in_specs=[
            pl.BlockSpec((tb, in_f), lambda i: (i, 0)),      # x: tiled over batch
            pl.BlockSpec((in_f, hid), lambda i: (0, 0)),     # w1: VMEM-resident
            pl.BlockSpec((1, hid), lambda i: (0, 0)),        # b1: VMEM-resident
            pl.BlockSpec((hid, out_f), lambda i: (0, 0)),    # w2: VMEM-resident
            pl.BlockSpec((1, out_f), lambda i: (0, 0)),      # b2: VMEM-resident
        ],
        out_specs=pl.BlockSpec((tb, out_f), lambda i: (i, 0)),
        compiler_params=pltpu.CompilerParams(
            dimension_semantics=("parallel",),
        ),
    )(x, params["w1"], params["b1"], params["w2"], params["b2"])

    return out


def reference_head(x, w1, b1, w2, b2):
    h = jnp.maximum(x @ w1 + b1, 0.0)
    return h @ w2 + b2


if __name__ == "__main__":
    # Small shapes consistent with CustomHead(in_features, hidden_features, out_features)
    in_features, hidden_features, out_features = 32, 64, 16

    key = jax.random.PRNGKey(0)
    kx, kw1, kb1, kw2, kb2, kx2 = jax.random.split(key, 6)

    # Deterministic synthetic parameters (PyTorch-like uniform init scale).
    lim1 = 1.0 / (in_features ** 0.5)
    lim2 = 1.0 / (hidden_features ** 0.5)
    w1 = jax.random.uniform(kw1, (in_features, hidden_features),
                            minval=-lim1, maxval=lim1, dtype=jnp.float32)
    b1 = jax.random.uniform(kb1, (hidden_features,),
                            minval=-lim1, maxval=lim1, dtype=jnp.float32)
    w2 = jax.random.uniform(kw2, (hidden_features, out_features),
                            minval=-lim2, maxval=lim2, dtype=jnp.float32)
    b2 = jax.random.uniform(kb2, (out_features,),
                            minval=-lim2, maxval=lim2, dtype=jnp.float32)

    params = init_custom_head(w1, b1, w2, b2)   # one-time weight prep

    # Case 1: tiny batch (single, partially-masked tile).
    B1 = 8
    x1 = jax.random.normal(kx, (B1, in_features), dtype=jnp.float32)
    out1 = jax.block_until_ready(custom_head(x1, params))
    ref1 = reference_head(x1, w1, b1, w2, b2)
    assert out1.shape == (B1, out_features)
    assert jnp.allclose(out1, ref1, atol=5e-2, rtol=5e-2)

    # Case 2: non-multiple-of-tile batch with grid > 1 (ragged last tile).
    B2 = 300
    x2 = jax.random.normal(kx2, (B2, in_features), dtype=jnp.float32)
    out2 = jax.block_until_ready(custom_head(x2, params, block_b=128))
    ref2 = reference_head(x2, w1, b1, w2, b2)
    assert out2.shape == (B2, out_features)
    assert jnp.allclose(out2, ref2, atol=5e-2, rtol=5e-2)

    # Case 3: default large tile (tb capped to the batch, single grid step).
    out3 = jax.block_until_ready(custom_head(x2, params))
    assert out3.shape == (B2, out_features)
    assert jnp.allclose(out3, ref2, atol=5e-2, rtol=5e-2)

    print("KERNEL_OK")
</pallas_src>

<mosaic_0001>
module attributes {stable_mosaic.version = 11 : i64} {
  func.func @custom_head_kernel(%arg0: i32, %arg1: memref<16x32xf32, #tpu.memory_space<vmem>>, %arg2: memref<32x64xbf16, #tpu.memory_space<vmem>>, %arg3: memref<1x64xf32, #tpu.memory_space<vmem>>, %arg4: memref<64x16xbf16, #tpu.memory_space<vmem>>, %arg5: memref<1x16xf32, #tpu.memory_space<vmem>>, %arg6: memref<16x16xf32, #tpu.memory_space<vmem>>) attributes {dimension_semantics = [#tpu.dimension_semantics<parallel>], iteration_bounds = array<i64: 1>, scalar_prefetch = 0 : i64, scratch_operands = 0 : i64, tpu.core_type = #tpu.core_type<tc>, window_params = [{transform_indices = @transform_0, window_bounds = array<i64: 16, 32>}, {pipeline_mode = #tpu.pipeline_mode<synchronous>, transform_indices = @transform_1, window_bounds = array<i64: 32, 64>}, {pipeline_mode = #tpu.pipeline_mode<synchronous>, transform_indices = @transform_2, window_bounds = array<i64: 1, 64>}, {pipeline_mode = #tpu.pipeline_mode<synchronous>, transform_indices = @transform_3, window_bounds = array<i64: 64, 16>}, {pipeline_mode = #tpu.pipeline_mode<synchronous>, transform_indices = @transform_4, window_bounds = array<i64: 1, 16>}, {transform_indices = @transform_5, window_bounds = array<i64: 16, 16>}]} {
    %c0 = arith.constant 0 : index
    %c0_0 = arith.constant 0 : index
    %0 = vector.load %arg1[%c0, %c0_0] : memref<16x32xf32, #tpu.memory_space<vmem>>, vector<16x32xf32>
    %1 = arith.truncf %0 : vector<16x32xf32> to vector<16x32xbf16>
    %c0_1 = arith.constant 0 : index
    %c0_2 = arith.constant 0 : index
    %2 = vector.load %arg2[%c0_1, %c0_2] : memref<32x64xbf16, #tpu.memory_space<vmem>>, vector<32x64xbf16>
    %cst = arith.constant dense<0.000000e+00> : vector<16x64xf32>
    %3 = tpu.matmul %1, %2, %cst {dimension_numbers = #tpu.dot_dimension_numbers<[1], [0], [0], [1], [0, 0, 1, 1], [], []>} : vector<16x32xbf16>, vector<32x64xbf16>, vector<16x64xf32> -> vector<16x64xf32>
    %c0_3 = arith.constant 0 : index
    %c0_4 = arith.constant 0 : index
    %4 = vector.load %arg3[%c0_3, %c0_4] : memref<1x64xf32, #tpu.memory_space<vmem>>, vector<1x64xf32>
    %5 = vector.broadcast %4 : vector<1x64xf32> to vector<16x64xf32>
    %6 = arith.addf %3, %5 : vector<16x64xf32>
    %cst_5 = arith.constant 0.000000e+00 : f32
    %7 = vector.broadcast %cst_5 : f32 to vector<16x64xf32>
    %8 = arith.maximumf %6, %7 : vector<16x64xf32>
    %9 = arith.truncf %8 : vector<16x64xf32> to vector<16x64xbf16>
    %c0_6 = arith.constant 0 : index
    %c0_7 = arith.constant 0 : index
    %10 = vector.load %arg4[%c0_6, %c0_7] : memref<64x16xbf16, #tpu.memory_space<vmem>>, vector<64x16xbf16>
    %cst_8 = arith.constant dense<0.000000e+00> : vector<16x16xf32>
    %11 = tpu.matmul %9, %10, %cst_8 {dimension_numbers = #tpu.dot_dimension_numbers<[1], [0], [0], [1], [0, 0, 1, 1], [], []>} : vector<16x64xbf16>, vector<64x16xbf16>, vector<16x16xf32> -> vector<16x16xf32>
    %c0_9 = arith.constant 0 : index
    %c0_10 = arith.constant 0 : index
    %12 = vector.load %arg5[%c0_9, %c0_10] : memref<1x16xf32, #tpu.memory_space<vmem>>, vector<1x16xf32>
    %13 = vector.broadcast %12 : vector<1x16xf32> to vector<16x16xf32>
    %14 = arith.addf %11, %13 : vector<16x16xf32>
    %c0_11 = arith.constant 0 : index
    %c0_12 = arith.constant 0 : index
    %15 = vector.load %arg6[%c0_11, %c0_12] : memref<16x16xf32, #tpu.memory_space<vmem>>, vector<16x16xf32>
    tpu.vector_store %arg6[%c0_11, %c0_12], %14 {strides = array<i32>} : memref<16x16xf32, #tpu.memory_space<vmem>>, vector<16x16xf32>,
    return
  }
  func.func @transform_0(%arg0: i32) -> (i32, i32) {
    %c0_i32 = arith.constant 0 : i32
    %c0_i32_0 = arith.constant 0 : i32
    return %arg0, %c0_i32 : i32, i32
  }
  func.func @transform_1(%arg0: i32) -> (i32, i32) {
    %c0_i32 = arith.constant 0 : i32
    %c0_i32_0 = arith.constant 0 : i32
    %c0_i32_1 = arith.constant 0 : i32
    return %c0_i32, %c0_i32_0 : i32, i32
  }
  func.func @transform_2(%arg0: i32) -> (i32, i32) {
    %c0_i32 = arith.constant 0 : i32
    %c0_i32_0 = arith.constant 0 : i32
    %c0_i32_1 = arith.constant 0 : i32
    return %c0_i32, %c0_i32_0 : i32, i32
  }
  func.func @transform_3(%arg0: i32) -> (i32, i32) {
    %c0_i32 = arith.constant 0 : i32
    %c0_i32_0 = arith.constant 0 : i32
    %c0_i32_1 = arith.constant 0 : i32
    return %c0_i32, %c0_i32_0 : i32, i32
  }
  func.func @transform_4(%arg0: i32) -> (i32, i32) {
    %c0_i32 = arith.constant 0 : i32
    %c0_i32_0 = arith.constant 0 : i32
    %c0_i32_1 = arith.constant 0 : i32
    return %c0_i32, %c0_i32_0 : i32, i32
  }
  func.func @transform_5(%arg0: i32) -> (i32, i32) {
    %c0_i32 = arith.constant 0 : i32
    %c0_i32_0 = arith.constant 0 : i32
    return %arg0, %c0_i32 : i32, i32
  }
}

</mosaic_0001>

<llo_original>
// kernel: tpu_custom_call.1
$region0: #{tpu_custom_call.1}
  #allocation0 [shape = 'u32[]', space=smem, size = 0x4, offset = 0x4, fixed_abs, tag = 'smem constant byte address 0x4 - core index']
  #allocation1 [shape = 'u32[144,128]{1,0:T(1,128)}', space=vmem, size = 0x12000, scoped, tag = 'internal scratch']
  %s0 = inlined_call_operand.vmem [shape: f32[8,32], index: 0, kind: input, shape index: {}]
  %s1 = inlined_call_operand.vmem [shape: bf16[32,64], index: 1, kind: input, shape index: {}]
  %s2 = inlined_call_operand.vmem [shape: f32[1,64], index: 2, kind: input, shape index: {}]
  %s3 = inlined_call_operand.vmem [shape: bf16[64,16], index: 3, kind: input, shape index: {}]
  %s4 = inlined_call_operand.vmem [shape: f32[1,16], index: 4, kind: input, shape index: {}]
  %s5 = inlined_call_operand.hbm [shape: f32[8,16], index: 5, kind: output, shape index: {}]
  %s6 = sld [smem:[#allocation0]]
  $region30: #{tpu_custom_call.1} parent=0
    _
  %s8 = ssub.s32 1, %s6
  %s9 = scalar_select 0, %s8, %s6
  $region1: #{tpu_custom_call.1} parent=0
    #allocation2 [shape = 'u8[8192]{0}', space=vmem, size = 0x2000, scoped, tag = 'output window, operand 0, single buffered']
    #allocation3 [shape = 's32[1]{0}', space=sflag, size = 0x4, scoped, tag = 'scoped memory for tpu_custom_call.1']
    %10 = vsyncpa [#allocation3], 0
    // Predicated region
    $region2: #{tpu_custom_call.1} parent=1 // pred_check
      _
    $region3: #{tpu_custom_call.1} parent=1 // pred_check_branch
      %12 = sbr.rel (0) target = $region5
    $region4: #{tpu_custom_call.1} parent=1 // pred_region
      _
    $region5: #{tpu_custom_call.1} parent=1 // pred_fallthru
      _
    // Predicated region
    $region6: #{tpu_custom_call.1} parent=1 // pred_check
      _
    $region7: #{tpu_custom_call.1} parent=1 // pred_check_branch
      %14 = sbr.rel (0) target = $region9
    $region8: #{tpu_custom_call.1} parent=1 // pred_region
      _
    $region9: #{tpu_custom_call.1} parent=1 // pred_fallthru
      _
    // Predicated region
    $region10: #{tpu_custom_call.1} parent=1 // pred_check
      _
    $region11: #{tpu_custom_call.1} parent=1 // pred_check_branch
      %16 = sbr.rel (0) target = $region13
    $region12: #{tpu_custom_call.1} parent=1 // pred_region
      _
    $region13: #{tpu_custom_call.1} parent=1 // pred_fallthru
      _
    // Predicated region
    $region14: #{tpu_custom_call.1} parent=1 // pred_check
      _
    $region15: #{tpu_custom_call.1} parent=1 // pred_check_branch
      %18 = sbr.rel (0) target = $region17
    $region16: #{tpu_custom_call.1} parent=1 // pred_region
      _
    $region17: #{tpu_custom_call.1} parent=1 // pred_fallthru
      _
    // Predicated region
    $region18: #{tpu_custom_call.1} parent=1 // pred_check
      _
    $region19: #{tpu_custom_call.1} parent=1 // pred_check_branch
      %20 = sbr.rel (0) target = $region21
    $region20: #{tpu_custom_call.1} parent=1 // pred_region
      _
    $region21: #{tpu_custom_call.1} parent=1 // pred_fallthru
      _
    %v22 = vld [vmem:[%s0] sm:$0xff]
    %v23 = vld [vmem:[%s0 + $0x8] sm:$0xff]
    %v24 = vpack.c.bf16 %v23, %v22
    %v25 = vld [vmem:[%s1] sm:$0xf]
    %v26 = vld [vmem:[%s1 + $0x4] sm:$0xf]
    %v27 = vld [vmem:[%s1 + $0x8] sm:$0xf]
    %v28 = vld [vmem:[%s1 + $0xc] sm:$0xf]
    %v29 = vld [vmem:[%s2] sm:$0x1]
    %v31 = vlaneseq
    %v32 = vshrl.u32 %v31, 7
    %v33 = vsub.s32 0, %v32
    %v34 = vrot.slane %v29, %v33
    %v40 = vunpack.c.l.b16 %v25
    %v41 = vunpack.c.l.b16 %v26
    %v42 = vunpack.c.l.b16 %v27
    %v43 = vunpack.c.l.b16 %v28
    %v44 = vpack.c.b16 %v41, %v40
    %v45 = vpack.c.b16 %v43, %v42
    %vm48 = vcmask 261120
    %v50 = vsel %vm48, %v24, 0
    %52 = vmatprep.subr.bf16.mxu0 0
    %53 = vmatpush1.bf16.msra.mxu0 %v44
    %54 = vmatprep.subr.bf16.mxu0 0
    %55 = vmatpush1.bf16.msra.mxu0 %v45
    %56 = vmatprep.subr.bf16.mxu0 0
    %57 = vmatpush1.bf16.msra.mxu0 0
    %58 = vmatprep.subr.bf16.mxu0 0
    %59 = vmatpush1.bf16.msra.mxu0 0
    %60 = vmatprep.subr.bf16.mxu0 0
    %61 = vmatpush1.bf16.msra.mxu0 0
    %62 = vmatprep.subr.bf16.mxu0 0
    %63 = vmatpush1.bf16.msra.mxu0 0
    %64 = vmatprep.subr.bf16.mxu0 0
    %65 = vmatpush1.bf16.msra.mxu0 0
    %66 = vmatprep.subr.bf16.mxu0 0
    %67 = vmatpush1.bf16.msra.mxu0 0
    %68 = vmatprep.subr.bf16.mxu0 0
    %69 = vmatpush1.bf16.msra.mxu0 0
    %70 = vmatprep.subr.bf16.mxu0 0
    %71 = vmatpush1.bf16.msra.mxu0 0
    %72 = vmatprep.subr.bf16.mxu0 0
    %73 = vmatpush1.bf16.msra.mxu0 0
    %74 = vmatprep.subr.bf16.mxu0 0
    %75 = vmatpush1.bf16.msra.mxu0 0
    %76 = vmatprep.subr.bf16.mxu0 0
    %77 = vmatpush1.bf16.msra.mxu0 0
    %78 = vmatprep.subr.bf16.mxu0 0
    %79 = vmatpush1.bf16.msra.mxu0 0
    %80 = vmatprep.subr.bf16.mxu0 0
    %81 = vmatpush1.bf16.msra.mxu0 0
    %82 = vmatprep.subr.bf16.mxu0 0
    %83 = vmatpush1.bf16.msra.mxu0 0
    %84 = vmatprep.mubr.bf16.mxu0 0
    %85 = vmatmul.mubr.bf16.gmra.mrb[0].mxu0 %v50
    %v86 = vpop.f32.mrb[0].mxu0
    %v87 = vadd.f32 %v34, %v86
    %v88 = vpop.f32.mrb[0].mxu0
    %v89 = vpop.f32.mrb[0].mxu0
    %v90 = vadd.f32 %v34, %v89
    %v91 = vpop.f32.mrb[0].mxu0
    %92 = vdwg.mxu0
    %v93 = vmax.f32 %v87, 0.0
    %v94 = vmax.f32 %v90, 0.0
    %v95 = vpack.c.bf16 %v94, %v93
    %v96 = vld [vmem:[%s3] sm:$0xf]
    %v97 = vld [vmem:[%s3 + $0x4] sm:$0xf]
    %v98 = vld [vmem:[%s3 + $0x8] sm:$0xf]
    %v99 = vld [vmem:[%s3 + $0xc] sm:$0xf]
    %v100 = vld [vmem:[%s3 + $0x10] sm:$0xf]
    %v101 = vld [vmem:[%s3 + $0x14] sm:$0xf]
    %v102 = vld [vmem:[%s3 + $0x18] sm:$0xf]
    %v103 = vld [vmem:[%s3 + $0x1c] sm:$0xf]
    %v104 = vld [vmem:[%s4] sm:$0x1]
    %v106 = vlaneseq
    %v107 = vshrl.u32 %v106, 7
    %v108 = vsub.s32 0, %v107
    %v109 = vrot.slane %v104, %v108
    %v119 = vunpack.c.l.b16 %v96
    %v120 = vunpack.c.l.b16 %v97
    %v121 = vunpack.c.l.b16 %v98
    %v122 = vunpack.c.l.b16 %v99
    %v123 = vunpack.c.l.b16 %v100
    %v124 = vunpack.c.l.b16 %v101
    %v125 = vunpack.c.l.b16 %v102
    %v126 = vunpack.c.l.b16 %v103
    %v127 = vpack.c.b16 %v120, %v119
    %v128 = vpack.c.b16 %v122, %v121
    %v129 = vpack.c.b16 %v124, %v123
    %v130 = vpack.c.b16 %v126, %v125
    %vm135 = vcmask 523264
    %v137 = vsel %vm135, %v95, 0
    %139 = vmatprep.subr.bf16.mxu0 0
    %140 = vmatpush1.bf16.msra.mxu0 %v127
    %141 = vmatprep.subr.bf16.mxu0 0
    %142 = vmatpush1.bf16.msra.mxu0 %v128
    %143 = vmatprep.subr.bf16.mxu0 0
    %144 = vmatpush1.bf16.msra.mxu0 %v129
    %145 = vmatprep.subr.bf16.mxu0 0
    %146 = vmatpush1.bf16.msra.mxu0 %v130
    %147 = vmatprep.subr.bf16.mxu0 0
    %148 = vmatpush1.bf16.msra.mxu0 0
    %149 = vmatprep.subr.bf16.mxu0 0
    %150 = vmatpush1.bf16.msra.mxu0 0
    %151 = vmatprep.subr.bf16.mxu0 0
    %152 = vmatpush1.bf16.msra.mxu0 0
    %153 = vmatprep.subr.bf16.mxu0 0
    %154 = vmatpush1.bf16.msra.mxu0 0
    %155 = vmatprep.subr.bf16.mxu0 0
    %156 = vmatpush1.bf16.msra.mxu0 0
    %157 = vmatprep.subr.bf16.mxu0 0
    %158 = vmatpush1.bf16.msra.mxu0 0
    %159 = vmatprep.subr.bf16.mxu0 0
    %160 = vmatpush1.bf16.msra.mxu0 0
    %161 = vmatprep.subr.bf16.mxu0 0
    %162 = vmatpush1.bf16.msra.mxu0 0
    %163 = vmatprep.subr.bf16.mxu0 0
    %164 = vmatpush1.bf16.msra.mxu0 0
    %165 = vmatprep.subr.bf16.mxu0 0
    %166 = vmatpush1.bf16.msra.mxu0 0
    %167 = vmatprep.subr.bf16.mxu0 0
    %168 = vmatpush1.bf16.msra.mxu0 0
    %169 = vmatprep.subr.bf16.mxu0 0
    %170 = vmatpush1.bf16.msra.mxu0 0
    %171 = vmatprep.mubr.bf16.mxu0 0
    %172 = vmatmul.mubr.bf16.gmra.mrb[0].mxu0 %v137
    %v173 = vpop.f32.mrb[0].mxu0
    %v174 = vadd.f32 %v109, %v173
    %v175 = vpop.f32.mrb[0].mxu0
    %v176 = vpop.f32.mrb[0].mxu0
    %v177 = vadd.f32 %v109, %v176
    %v178 = vpop.f32.mrb[0].mxu0
    %179 = vdwg.mxu0
    %vm180 = vcmask 130048
    %181 = vst.msk [vmem:[#allocation2] sm:$0xff] %vm180, %v174
    %182 = vst.msk [vmem:[#allocation2 + $0x8] sm:$0xff] %vm180, %v177
    // Predicated region
    $region22: #{tpu_custom_call.1} parent=1 // pred_check
      _
    $region23: #{tpu_custom_call.1} parent=1 // pred_check_branch
      %184 = sbr.rel (0) target = $region25
    $region24: #{tpu_custom_call.1} parent=1 // pred_region
      %s186 = ssub.s32 256, 128
      %187 = vsyncadd [#allocation3], %s186
      %s188 = sshll.u32 [#allocation2], 4
      %s189 = int_to_ptr.vmem [resolvable:$true] %s188
      %194 = dma.vmem_to_hbm [thread:$0]  %s189, 128, %s5, [#allocation3], 128, 128, 8
    $region25: #{tpu_custom_call.1} parent=1 // pred_fallthru
      _
    // Predicated region
    $region26: #{tpu_custom_call.1} parent=1 // pred_check
      _
    $region27: #{tpu_custom_call.1} parent=1 // pred_check_branch
      %196 = sbr.rel (0) target = $region29
    $region28: #{tpu_custom_call.1} parent=1 // pred_region
      %197 = dma.done [#allocation3], 256
    $region29: #{tpu_custom_call.1} parent=1 // pred_fallthru
      _
    %198 = vsyncpa [#allocation3], 1

</llo_original>
